<compile_context>
chip_gen: v7x
topology: tpu7x:2x2x1
jax: 0.10.0
libtpu: 0.0.40
codegen_flags: <defaults>
</compile_context>

<pallas_src>
import jax
import jax.numpy as jnp
from jax import lax
from jax.experimental import pallas as pl
from jax.experimental.pallas import tpu as pltpu

EPS = 1e-4
NEG_SLOPE = 0.01


def _linear_bn_lrelu_kernel(x_ref, w_ref, o_ref, acc_ref):
    # x_ref:   (B, tk)   VMEM (f32 or bf16)
    # w_ref:   (tn, tk)  VMEM (f32 or bf16)  -- weight kept as (out, in)
    # o_ref:   (B, tn)   VMEM f32
    # acc_ref: (B, tn)   VMEM f32 scratch, resident across the K grid axis
    k = pl.program_id(1)

    @pl.when(k == 0)
    def _init():
        acc_ref[...] = jnp.zeros_like(acc_ref)

    # MXU: contract x's K dim with weight's K dim (no pre-transposed weight
    # materialized in HBM); f32 accumulation.
    acc_ref[...] += lax.dot_general(
        x_ref[...],
        w_ref[...],
        dimension_numbers=(((1,), (1,)), ((), ())),
        preferred_element_type=jnp.float32,
    )

    @pl.when(k == pl.num_programs(1) - 1)
    def _finalize():
        y = acc_ref[...]                                   # (B, tn) f32
        inv_b = jnp.float32(1.0 / y.shape[0])
        # One-pass BN statistics (biased variance), per feature (axis=0).
        s1 = jnp.sum(y, axis=0, keepdims=True)             # (1, tn)
        s2 = jnp.sum(y * y, axis=0, keepdims=True)         # (1, tn)
        mean = s1 * inv_b
        var = s2 * inv_b - mean * mean
        inv_std = lax.rsqrt(var + EPS)                     # EUP slot
        scale = inv_std
        shift = mean * inv_std
        y_hat = y * scale - shift
        # Leaky ReLU, negative_slope = 0.01.
        o_ref[...] = jnp.where(y_hat >= 0, y_hat, NEG_SLOPE * y_hat).astype(o_ref.dtype)


def _pick_tile(dim, pref):
    """Largest of (pref clipped to dim) that evenly divides dim, else full dim."""
    pref = min(pref, dim)
    return pref if dim % pref == 0 else dim


def linear_bn_leaky_relu(x, weight, *, tn=None, tk=None, use_bf16=True):
    """x: (B, in_features); weight: (out_features, in_features) like nn.Linear."""
    B, K = x.shape
    N, K2 = weight.shape
    assert K == K2, "weight must be (out_features, in_features)"

    if use_bf16:
        # bf16 MXU inputs, f32 accumulate inside the kernel (halves HBM traffic).
        x = x.astype(jnp.bfloat16)
        weight = weight.astype(jnp.bfloat16)

    tn = _pick_tile(N, tn if tn is not None else 256)   # lane-dense output tile
    tk = _pick_tile(K, tk if tk is not None else 256)
    grid = (N // tn, K // tk)                            # N (parallel), K (reduction, last)

    elt = 2 if use_bf16 else 4
    # Double-buffered I/O tiles + resident f32 accumulator, plus headroom.
    tile_bytes = 2 * (B * tk * elt + tn * tk * elt + B * tn * 4) + B * tn * 4
    vmem_limit = min(max(int(tile_bytes * 1.5) + (4 << 20), 16 << 20), 64 << 20)

    cost = pl.CostEstimate(
        flops=2 * B * K * N,
        transcendentals=N,                               # rsqrt per feature
        bytes_accessed=B * K * elt + N * K * elt + B * N * 4,
    )

    return pl.pallas_call(
        _linear_bn_lrelu_kernel,
        out_shape=jax.ShapeDtypeStruct((B, N), jnp.float32),
        grid_spec=pltpu.PrefetchScalarGridSpec(
            num_scalar_prefetch=0,
            grid=grid,
            in_specs=[
                pl.BlockSpec((B, tk), lambda i, k: (0, k)),    # x: full batch, K tile
                pl.BlockSpec((tn, tk), lambda i, k: (i, k)),   # weight (out, in) tile
            ],
            out_specs=pl.BlockSpec((B, tn), lambda i, k: (0, i)),
            scratch_shapes=[pltpu.VMEM((B, tn), jnp.float32)],
        ),
        compiler_params=pltpu.CompilerParams(
            dimension_semantics=("parallel", "arbitrary"),
            vmem_limit_bytes=vmem_limit,
        ),
        cost_estimate=cost,
    )(x, weight)


if __name__ == "__main__":
    key = jax.random.PRNGKey(0)
    k_x, k_w = jax.random.split(key)

    # Small but lane-dense shapes (multiples of 128 on feature dims) so the
    # output stores are unmasked and the grid (2, 2) exercises N tiling + K
    # accumulation.
    B, in_features, out_features = 64, 256, 256

    x = jax.random.normal(k_x, (B, in_features), dtype=jnp.float32)
    bound = 1.0 / (in_features ** 0.5)
    weight = jax.random.uniform(
        k_w, (out_features, in_features), minval=-bound, maxval=bound,
        dtype=jnp.float32,
    )

    # Pure-JAX f32 reference (training-mode BN, biased variance, slope 0.01).
    y = x @ weight.T
    mean = y.mean(axis=0, keepdims=True)
    var = ((y - mean) ** 2).mean(axis=0, keepdims=True)
    y_hat = (y - mean) / jnp.sqrt(var + EPS)
    ref = jnp.where(y_hat >= 0, y_hat, NEG_SLOPE * y_hat)

    # Exact-semantics path (f32 MXU inputs).
    out_f32 = linear_bn_leaky_relu(x, weight, tn=128, tk=128, use_bf16=False)
    jax.block_until_ready(out_f32)
    assert jnp.allclose(out_f32, ref, atol=1e-4, rtol=1e-4), "f32 path mismatch"

    # Fast path (bf16 MXU inputs, f32 accumulate) — slightly looser tolerance.
    out_bf16 = linear_bn_leaky_relu(x, weight, tn=128, tk=128, use_bf16=True)
    jax.block_until_ready(out_bf16)
    assert jnp.allclose(out_bf16, ref, atol=5e-2, rtol=5e-2), "bf16 path mismatch"

    print("KERNEL_OK")
</pallas_src>

<mosaic_0001>
module attributes {stable_mosaic.version = 11 : i64} {
  func.func @_linear_bn_lrelu_kernel(%arg0: i32, %arg1: i32, %arg2: memref<64x128xf32, #tpu.memory_space<vmem>>, %arg3: memref<128x128xf32, #tpu.memory_space<vmem>>, %arg4: memref<64x128xf32, #tpu.memory_space<vmem>>, %arg5: memref<64x128xf32, #tpu.memory_space<vmem>>) attributes {dimension_semantics = [#tpu.dimension_semantics<parallel>, #tpu.dimension_semantics<arbitrary>], iteration_bounds = array<i64: 2, 2>, scalar_prefetch = 0 : i64, scratch_operands = 1 : i64, tpu.core_type = #tpu.core_type<tc>, window_params = [{transform_indices = @transform_0, window_bounds = array<i64: 64, 128>}, {transform_indices = @transform_1, window_bounds = array<i64: 128, 128>}, {transform_indices = @transform_2, window_bounds = array<i64: 64, 128>}]} {
    %c0_i32 = arith.constant 0 : i32
    %0 = arith.cmpi eq, %arg1, %c0_i32 : i32
    %1 = arith.extui %0 : i1 to i32
    %c0_i32_0 = arith.constant 0 : i32
    %2 = arith.cmpi ne, %1, %c0_i32_0 : i32
    scf.if %2 {
      %cst_9 = arith.constant 0.000000e+00 : f32
      %12 = vector.broadcast %cst_9 : f32 to vector<64x128xf32>
      %c0_10 = arith.constant 0 : index
      %c0_11 = arith.constant 0 : index
      %13 = vector.load %arg5[%c0_10, %c0_11] : memref<64x128xf32, #tpu.memory_space<vmem>>, vector<64x128xf32>
      tpu.vector_store %arg5[%c0_10, %c0_11], %12 {strides = array<i32>} : memref<64x128xf32, #tpu.memory_space<vmem>>, vector<64x128xf32>,
    } else {
    }
    %c0 = arith.constant 0 : index
    %c0_1 = arith.constant 0 : index
    %3 = vector.load %arg5[%c0, %c0_1] : memref<64x128xf32, #tpu.memory_space<vmem>>, vector<64x128xf32>
    %c0_2 = arith.constant 0 : index
    %c0_3 = arith.constant 0 : index
    %4 = vector.load %arg2[%c0_2, %c0_3] : memref<64x128xf32, #tpu.memory_space<vmem>>, vector<64x128xf32>
    %c0_4 = arith.constant 0 : index
    %c0_5 = arith.constant 0 : index
    %5 = vector.load %arg3[%c0_4, %c0_5] : memref<128x128xf32, #tpu.memory_space<vmem>>, vector<128x128xf32>
    %cst = arith.constant dense<0.000000e+00> : vector<64x128xf32>
    %6 = tpu.matmul %4, %5, %cst {dimension_numbers = #tpu.dot_dimension_numbers<[1], [1], [0], [0], [0, 0, 1, 0], [], []>} : vector<64x128xf32>, vector<128x128xf32>, vector<64x128xf32> -> vector<64x128xf32>
    %7 = arith.addf %3, %6 : vector<64x128xf32>
    %c0_6 = arith.constant 0 : index
    %c0_7 = arith.constant 0 : index
    %8 = vector.load %arg5[%c0_6, %c0_7] : memref<64x128xf32, #tpu.memory_space<vmem>>, vector<64x128xf32>
    tpu.vector_store %arg5[%c0_6, %c0_7], %7 {strides = array<i32>} : memref<64x128xf32, #tpu.memory_space<vmem>>, vector<64x128xf32>,
    %c1_i32 = arith.constant 1 : i32
    %9 = arith.cmpi eq, %arg1, %c1_i32 : i32
    %10 = arith.extui %9 : i1 to i32
    %c0_i32_8 = arith.constant 0 : i32
    %11 = arith.cmpi ne, %10, %c0_i32_8 : i32
    scf.if %11 {
      %c0_9 = arith.constant 0 : index
      %c0_10 = arith.constant 0 : index
      %12 = vector.load %arg5[%c0_9, %c0_10] : memref<64x128xf32, #tpu.memory_space<vmem>>, vector<64x128xf32>
      %cst_11 = arith.constant dense<0.000000e+00> : vector<128xf32>
      %13 = vector.multi_reduction <add>, %12, %cst_11 [0] : vector<64x128xf32> to vector<128xf32>
      %14 = vector.shape_cast %13 : vector<128xf32> to vector<1x128xf32>
      %15 = arith.mulf %12, %12 : vector<64x128xf32>
      %cst_12 = arith.constant dense<0.000000e+00> : vector<128xf32>
      %16 = vector.multi_reduction <add>, %15, %cst_12 [0] : vector<64x128xf32> to vector<128xf32>
      %17 = vector.shape_cast %16 : vector<128xf32> to vector<1x128xf32>
      %cst_13 = arith.constant 1.562500e-02 : f32
      %18 = vector.broadcast %cst_13 : f32 to vector<1x128xf32>
      %19 = arith.mulf %14, %18 : vector<1x128xf32>
      %cst_14 = arith.constant 1.562500e-02 : f32
      %20 = vector.broadcast %cst_14 : f32 to vector<1x128xf32>
      %21 = arith.mulf %17, %20 : vector<1x128xf32>
      %22 = arith.mulf %19, %19 : vector<1x128xf32>
      %23 = arith.subf %21, %22 : vector<1x128xf32>
      %cst_15 = arith.constant 9.99999974E-5 : f32
      %24 = vector.broadcast %cst_15 : f32 to vector<1x128xf32>
      %25 = arith.addf %23, %24 : vector<1x128xf32>
      %26 = math.rsqrt %25 : vector<1x128xf32>
      %27 = arith.mulf %19, %26 : vector<1x128xf32>
      %28 = vector.broadcast %26 : vector<1x128xf32> to vector<64x128xf32>
      %29 = arith.mulf %12, %28 : vector<64x128xf32>
      %30 = vector.broadcast %27 : vector<1x128xf32> to vector<64x128xf32>
      %31 = arith.subf %29, %30 : vector<64x128xf32>
      %cst_16 = arith.constant 0.000000e+00 : f32
      %32 = vector.broadcast %cst_16 : f32 to vector<64x128xf32>
      %33 = arith.cmpf oge, %31, %32 : vector<64x128xf32>
      %cst_17 = arith.constant 0.00999999977 : f32
      %34 = vector.broadcast %cst_17 : f32 to vector<64x128xf32>
      %35 = arith.mulf %34, %31 : vector<64x128xf32>
      %36 = arith.select %33, %31, %35 : vector<64x128xi1>, vector<64x128xf32>
      %c0_18 = arith.constant 0 : index
      %c0_19 = arith.constant 0 : index
      %37 = vector.load %arg4[%c0_18, %c0_19] : memref<64x128xf32, #tpu.memory_space<vmem>>, vector<64x128xf32>
      tpu.vector_store %arg4[%c0_18, %c0_19], %36 {strides = array<i32>} : memref<64x128xf32, #tpu.memory_space<vmem>>, vector<64x128xf32>,
    } else {
    }
    return
  }
  func.func @transform_0(%arg0: i32, %arg1: i32) -> (i32, i32) {
    %c0_i32 = arith.constant 0 : i32
    %c0_i32_0 = arith.constant 0 : i32
    return %c0_i32, %arg1 : i32, i32
  }
  func.func @transform_1(%arg0: i32, %arg1: i32) -> (i32, i32) {
    %c0_i32 = arith.constant 0 : i32
    return %arg0, %arg1 : i32, i32
  }
  func.func @transform_2(%arg0: i32, %arg1: i32) -> (i32, i32) {
    %c0_i32 = arith.constant 0 : i32
    %c0_i32_0 = arith.constant 0 : i32
    return %c0_i32, %arg0 : i32, i32
  }
}

</mosaic_0001>

<llo_original>
// kernel: tpu_custom_call.1
$region0: #{tpu_custom_call.1}
  #allocation0 [shape = 'u32[]', space=smem, size = 0x4, offset = 0x4, fixed_abs, tag = 'smem constant byte address 0x4 - core index']
  #allocation1 [shape = 'u32[144,128]{1,0:T(1,128)}', space=vmem, size = 0x12000, scoped, tag = 'internal scratch']
  #allocation2 [shape = 'f32[64,128]{1,0:T(8,128)}', space=vmem, size = 0x8000, scoped, tag = 'scratch operand']
  %s0 = inlined_call_operand.hbm [shape: f32[64,256], index: 0, kind: input, shape index: {}]
  %s1 = inlined_call_operand.hbm [shape: f32[256,256], index: 1, kind: input, shape index: {}]
  %s2 = inlined_call_operand.hbm [shape: f32[64,256], index: 2, kind: output, shape index: {}]
  %s3 = sld [smem:[#allocation0]]
  $region57: #{tpu_custom_call.1} parent=0
    _
  %s5 = ssub.s32 1, %s3
  %s6 = scalar_select 0, %s5, %s3
  $region1: #{tpu_custom_call.1} parent=0
    #allocation3 [shape = 'u8[65536]{0}', space=vmem, size = 0x10000, scoped, tag = 'input window, operand 0']
    #allocation4 [shape = 's32[2]{0}', space=sflag, size = 0x8, scoped, tag = 'scoped memory for tpu_custom_call.1']
    #allocation5 [shape = 's32[2]{0}', space=sflag, size = 0x8, scoped, tag = 'scoped memory for tpu_custom_call.1']
    #allocation6 [shape = 'u8[131072]{0}', space=vmem, size = 0x20000, scoped, tag = 'input window, operand 1']
    #allocation7 [shape = 's32[2]{0}', space=sflag, size = 0x8, scoped, tag = 'scoped memory for tpu_custom_call.1']
    #allocation8 [shape = 'u8[65536]{0}', space=vmem, size = 0x10000, scoped, tag = 'output window, operand 0']
    %7 = vsyncpa [#allocation4], 0
    %s8 = scalar_lea.sflag [#allocation4], 1
    %9 = vsyncpa %s8, 0
    %10 = vsyncpa [#allocation7], 0
    %s11 = scalar_lea.sflag [#allocation7], 1
    %12 = vsyncpa %s11, 0
    %13 = vsyncpa [#allocation5], 0
    %s14 = scalar_lea.sflag [#allocation5], 1
    %15 = vsyncpa %s14, 0
    loop: start=0, step=1, limit=6
    $region2: #{tpu_custom_call.1} parent=1 // loop_pre_header
      _
    $region3: #{tpu_custom_call.1} parent=1 // loop_header
      %s17 = sphi 0, %s21
      %p18 = scmp.ge.s32.totalorder %s17, 6
      %s24 = sphi 0, %s36
      %s25 = sphi 0, %s32
      %s26 = sphi 0, %s24
      %s27 = sphi 0, %s25
      %s28 = sphi 0, %s26
      %s29 = sphi 0, %s27
      %s39 = sphi 0, %s41
      %s42 = sphi 0, %s39
      %s43 = sphi 0, %s42
      %s59 = sphi 0, %s43
      %s67 = sphi 0, %s69
      %s70 = sphi 0, %s67
      %s71 = sphi 0, %s70
      %s87 = sphi 0, %s71
      %s93 = sphi 0, %s95
      %s96 = sphi 0, %s93
      %s97 = sphi 0, %s96
      %s113 = sphi 0, %s97
    $region4: #{tpu_custom_call.1} parent=1 // loop_header_branch
      %20 = sbr.rel (%p18) target = $region8
    $region5: #{tpu_custom_call.1} parent=1 // loop_body
      %s22 = ssub.s32 %s17, 1
      %s23 = ssub.s32 %s17, 2
      %s30 = sadd.s32 1, %s25
      %p31 = scmp.ge.s32.totalorder %s30, 2
      %s32 = scalar_select %p31, 0, %s30
      %s33 = sadd.s32 1, %s24
      %s34 = scalar_select %p31, %s33, %s24
      %p35 = scmp.ge.s32.totalorder %s34, 2
      %s36 = scalar_select %p35, 0, %s34
      %s37 = ssub.s32 %s25, %s32
      %p38 = scmp.eq.s32.totalorder %s37, 0
      %s40 = sadd.s32 %s39, 1
      %s41 = scalar_select %p38, %s39, %s40
      %p44 = pneg %p38
      %p45 = scmp.eq.s32.totalorder %s17, 3
      %p46 = por %p44, %p45
      %p47 = scmp.ne.s32.totalorder %s39, %s42
      %p48 = scmp.eq.s32.totalorder %s17, 0
      %p49 = por %p47, %p48
      %p50 = scmp.ne.s32.totalorder %s39, %s42
      %p51 = scmp.eq.s32.totalorder %s22, 3
      %p52 = por %p50, %p51
      %p53 = scmp.ne.s32.totalorder %s42, %s43
      %p54 = scmp.eq.s32.totalorder %s22, 0
      %p55 = por %p53, %p54
      %p56 = scmp.ne.s32.totalorder %s42, %s43
      %p57 = scmp.eq.s32.totalorder %s23, 3
      %p58 = por %p56, %p57
      %p60 = scmp.ne.s32.totalorder %s43, %s59
      %p61 = scmp.eq.s32.totalorder %s23, 0
      %p62 = por %p60, %p61
      %s63 = ssub.s32 %s24, %s36
      %s64 = ssub.s32 %s25, %s32
      %s65 = sor.u32 %s63, %s64
      %p66 = scmp.eq.s32.totalorder %s65, 0
      %s68 = sadd.s32 %s67, 1
      %s69 = scalar_select %p66, %s67, %s68
      %p72 = pneg %p66
      %p73 = scmp.eq.s32.totalorder %s17, 3
      %p74 = por %p72, %p73
      %p75 = scmp.ne.s32.totalorder %s67, %s70
      %p76 = scmp.eq.s32.totalorder %s17, 0
      %p77 = por %p75, %p76
      %p78 = scmp.ne.s32.totalorder %s67, %s70
      %p79 = scmp.eq.s32.totalorder %s22, 3
      %p80 = por %p78, %p79
      %p81 = scmp.ne.s32.totalorder %s70, %s71
      %p82 = scmp.eq.s32.totalorder %s22, 0
      %p83 = por %p81, %p82
      %p84 = scmp.ne.s32.totalorder %s70, %s71
      %p85 = scmp.eq.s32.totalorder %s23, 3
      %p86 = por %p84, %p85
      %p88 = scmp.ne.s32.totalorder %s71, %s87
      %p89 = scmp.eq.s32.totalorder %s23, 0
      %p90 = por %p88, %p89
      %s91 = ssub.s32 %s24, %s36
      %p92 = scmp.eq.s32.totalorder %s91, 0
      %s94 = sadd.s32 %s93, 1
      %s95 = scalar_select %p92, %s93, %s94
      %p98 = pneg %p92
      %p99 = scmp.eq.s32.totalorder %s17, 3
      %p100 = por %p98, %p99
      %p101 = scmp.ne.s32.totalorder %s93, %s96
      %p102 = scmp.eq.s32.totalorder %s17, 0
      %p103 = por %p101, %p102
      %p104 = scmp.ne.s32.totalorder %s93, %s96
      %p105 = scmp.eq.s32.totalorder %s22, 3
      %p106 = por %p104, %p105
      %p107 = scmp.ne.s32.totalorder %s96, %s97
      %p108 = scmp.eq.s32.totalorder %s22, 0
      %p109 = por %p107, %p108
      %p110 = scmp.ne.s32.totalorder %s96, %s97
      %p111 = scmp.eq.s32.totalorder %s23, 3
      %p112 = por %p110, %p111
      %p114 = scmp.ne.s32.totalorder %s97, %s113
      %p115 = scmp.eq.s32.totalorder %s23, 0
      %p116 = por %p114, %p115
      %p117 = scmp.le.s32.totalorder 1, %s17
      %p118 = scmp.lt.s32.totalorder %s17, 5
      %p119 = pnand %p117, %p118
      %p120 = pneg %p119
      // Predicated region
      $region9: #{tpu_custom_call.1} parent=5 // pred_check
        _
      $region10: #{tpu_custom_call.1} parent=5 // pred_check_branch
        %122 = sbr.rel (%p119) target = $region12
      $region11: #{tpu_custom_call.1} parent=5 // pred_region
        %s123 = ssub.s32 %s17, 1
      $region12: #{tpu_custom_call.1} parent=5 // pred_fallthru
        _
      %p124 = scmp.lt.s32.totalorder %s17, 4
      // Predicated region
      $region13: #{tpu_custom_call.1} parent=5 // pred_check
        %p125 = pneg %p124
      $region14: #{tpu_custom_call.1} parent=5 // pred_check_branch
        %127 = sbr.rel (%p125) target = $region16
      $region15: #{tpu_custom_call.1} parent=5 // pred_region
        // Predicated region
        $region17: #{tpu_custom_call.1} parent=15 // pred_check
          %p128 = pneg %p49
        $region18: #{tpu_custom_call.1} parent=15 // pred_check_branch
          %130 = sbr.rel (%p128) target = $region20
        $region19: #{tpu_custom_call.1} parent=15 // pred_region
          %s131 = sand.u32 %s39, 1
          %s132 = scalar_lea.sflag [#allocation4], %s131
          %s133 = sand.u32 %s39, 1
          %s134 = smul.addr %s133, 64
          %s135 = scalar_lea.vmem [#allocation3], %s134
          %s137 = ssub.s32 1024, 1024
          %138 = vsyncadd %s132, %s137
          %s139 = smul.addr %s25, 128
          %s140 = scalar_lea.hbm %s0, %s139
          %s141 = sshll.u32 %s135, 4
          %s142 = int_to_ptr.vmem [resolvable:$true] %s141
          %147 = dma.hbm_to_vmem [thread:$0]  %s140, 1024, %s142, %s132, 256, 128, 8
        $region20: #{tpu_custom_call.1} parent=15 // pred_fallthru
          _
        // Predicated region
        $region21: #{tpu_custom_call.1} parent=15 // pred_check
          %p148 = pneg %p77
        $region22: #{tpu_custom_call.1} parent=15 // pred_check_branch
          %150 = sbr.rel (%p148) target = $region24
        $region23: #{tpu_custom_call.1} parent=15 // pred_region
          %s151 = sand.u32 %s67, 1
          %s152 = scalar_lea.sflag [#allocation7], %s151
          %s153 = sand.u32 %s67, 1
          %s154 = smul.addr %s153, 128
          %s155 = scalar_lea.vmem [#allocation6], %s154
          %s156 = smul.u32 16, %s24
          %s158 = ssub.s32 2048, 2048
          %159 = vsyncadd %s152, %s158
          %s160 = smul.addr %s156, 2
          %s161 = sadd.s32 %s25, %s160
          %s162 = smul.addr %s161, 128
          %s163 = scalar_lea.hbm %s1, %s162
          %s164 = sshll.u32 %s155, 4
          %s165 = int_to_ptr.vmem [resolvable:$true] %s164
          %170 = dma.hbm_to_vmem [thread:$0]  %s163, 2048, %s165, %s152, 256, 128, 8
        $region24: #{tpu_custom_call.1} parent=15 // pred_fallthru
          _
      $region16: #{tpu_custom_call.1} parent=5 // pred_fallthru
        _
      %p171 = scmp.le.s32.totalorder 1, %s17
      %p172 = scmp.lt.s32.totalorder %s17, 5
      %p173 = pnand %p171, %p172
      %p174 = pneg %p173
      // Predicated region
      $region25: #{tpu_custom_call.1} parent=5 // pred_check
        _
      $region26: #{tpu_custom_call.1} parent=5 // pred_check_branch
        %176 = sbr.rel (%p173) target = $region28
      $region27: #{tpu_custom_call.1} parent=5 // pred_region
        %s177 = ssub.s32 %s17, 1
        %s178 = sand.u32 %s42, 1
        %s179 = scalar_lea.sflag [#allocation4], %s178
        %s180 = sand.u32 %s42, 1
        %s181 = smul.addr %s180, 64
        %s182 = scalar_lea.vmem [#allocation3], %s181
        // Predicated region
        $region29: #{tpu_custom_call.1} parent=27 // pred_check
          %p183 = pneg %p55
        $region30: #{tpu_custom_call.1} parent=27 // pred_check_branch
          %185 = sbr.rel (%p183) target = $region32
        $region31: #{tpu_custom_call.1} parent=27 // pred_region
          %186 = dma.done %s179, 1024
        $region32: #{tpu_custom_call.1} parent=27 // pred_fallthru
          _
        %s187 = sand.u32 %s70, 1
        %s188 = scalar_lea.sflag [#allocation7], %s187
        %s189 = sand.u32 %s70, 1
        %s190 = smul.addr %s189, 128
        %s191 = scalar_lea.vmem [#allocation6], %s190
        // Predicated region
        $region33: #{tpu_custom_call.1} parent=27 // pred_check
          %p192 = pneg %p83
        $region34: #{tpu_custom_call.1} parent=27 // pred_check_branch
          %194 = sbr.rel (%p192) target = $region36
        $region35: #{tpu_custom_call.1} parent=27 // pred_region
          %195 = dma.done %s188, 2048
        $region36: #{tpu_custom_call.1} parent=27 // pred_fallthru
          _
        %s196 = sand.u32 %s42, 1
        %s197 = scalar_lea.sflag [#allocation4], %s196
        %s198 = sand.u32 %s42, 1
        %s199 = smul.addr %s198, 64
        %s200 = scalar_lea.vmem [#allocation3], %s199
        %p201 = pneg %p55
        %p202 = pneg %p52
        %s203 = sand.u32 %s70, 1
        %s204 = scalar_lea.sflag [#allocation7], %s203
        %s205 = sand.u32 %s70, 1
        %s206 = smul.addr %s205, 128
        %s207 = scalar_lea.vmem [#allocation6], %s206
        %p208 = pneg %p83
        %p209 = pneg %p80
        %p210 = pneg %p109
        %p211 = pneg %p106
        %s212 = sand.u32 %s96, 1
        %s213 = scalar_lea.sflag [#allocation5], %s212
        %s214 = sand.u32 %s96, 1
        %s215 = smul.addr %s214, 64
        %s216 = scalar_lea.vmem [#allocation8], %s215
        %s217 = smul.u32 16, %s26
        %p218 = scmp.eq.s32.totalorder %s27, 0
        // Predicated region
        $region37: #{tpu_custom_call.1} parent=27 // pred_check
          %p219 = pneg %p218
        $region38: #{tpu_custom_call.1} parent=27 // pred_check_branch
          %221 = sbr.rel (%p219) target = $region40
        $region39: #{tpu_custom_call.1} parent=27 // pred_region
          %222 = vst [vmem:[#allocation2] sm:$0xff] 0.0
          %223 = vst [vmem:[#allocation2 + $0x8] sm:$0xff] 0.0
          %224 = vst [vmem:[#allocation2 + $0x10] sm:$0xff] 0.0
          %225 = vst [vmem:[#allocation2 + $0x18] sm:$0xff] 0.0
          %226 = vst [vmem:[#allocation2 + $0x20] sm:$0xff] 0.0
          %227 = vst [vmem:[#allocation2 + $0x28] sm:$0xff] 0.0
          %228 = vst [vmem:[#allocation2 + $0x30] sm:$0xff] 0.0
          %229 = vst [vmem:[#allocation2 + $0x38] sm:$0xff] 0.0
        $region40: #{tpu_custom_call.1} parent=27 // pred_fallthru
          _
        %v230 = vld [vmem:[#allocation2] sm:$0xff]
        %v231 = vld [vmem:[#allocation2 + $0x8] sm:$0xff]
        %v232 = vld [vmem:[#allocation2 + $0x10] sm:$0xff]
        %v233 = vld [vmem:[#allocation2 + $0x18] sm:$0xff]
        %v234 = vld [vmem:[#allocation2 + $0x20] sm:$0xff]
        %v235 = vld [vmem:[#allocation2 + $0x28] sm:$0xff]
        %v236 = vld [vmem:[#allocation2 + $0x30] sm:$0xff]
        %v237 = vld [vmem:[#allocation2 + $0x38] sm:$0xff]
        %v238 = vld [vmem:[%s182] sm:$0xff]
        %v239 = vld [vmem:[%s182 + $0x8] sm:$0xff]
        %v240 = vld [vmem:[%s182 + $0x10] sm:$0xff]
        %v241 = vld [vmem:[%s182 + $0x18] sm:$0xff]
        %v242 = vld [vmem:[%s182 + $0x20] sm:$0xff]
        %v243 = vld [vmem:[%s182 + $0x28] sm:$0xff]
        %v244 = vld [vmem:[%s182 + $0x30] sm:$0xff]
        %v245 = vld [vmem:[%s182 + $0x38] sm:$0xff]
        %v246 = vld [vmem:[%s191] sm:$0xff]
        %v247 = vld [vmem:[%s191 + $0x8] sm:$0xff]
        %v248 = vld [vmem:[%s191 + $0x10] sm:$0xff]
        %v249 = vld [vmem:[%s191 + $0x18] sm:$0xff]
        %v250 = vld [vmem:[%s191 + $0x20] sm:$0xff]
        %v251 = vld [vmem:[%s191 + $0x28] sm:$0xff]
        %v252 = vld [vmem:[%s191 + $0x30] sm:$0xff]
        %v253 = vld [vmem:[%s191 + $0x38] sm:$0xff]
        %v254 = vld [vmem:[%s191 + $0x40] sm:$0xff]
        %v255 = vld [vmem:[%s191 + $0x48] sm:$0xff]
        %v256 = vld [vmem:[%s191 + $0x50] sm:$0xff]
        %v257 = vld [vmem:[%s191 + $0x58] sm:$0xff]
        %v258 = vld [vmem:[%s191 + $0x60] sm:$0xff]
        %v259 = vld [vmem:[%s191 + $0x68] sm:$0xff]
        %v260 = vld [vmem:[%s191 + $0x70] sm:$0xff]
        %v261 = vld [vmem:[%s191 + $0x78] sm:$0xff]
        %262 = vmatprep.subr.mxu0 0.0
        %263 = vmatpush1.xpose.msra.mxu0 %v246
        %264 = vmatprep.subr.mxu0 0.0
        %265 = vmatpush1.xpose.msra.mxu0 %v247
        %266 = vmatprep.subr.mxu0 0.0
        %267 = vmatpush1.xpose.msra.mxu0 %v248
        %268 = vmatprep.subr.mxu0 0.0
        %269 = vmatpush1.xpose.msra.mxu0 %v249
        %270 = vmatprep.subr.mxu0 0.0
        %271 = vmatpush1.xpose.msra.mxu0 %v250
        %272 = vmatprep.subr.mxu0 0.0
        %273 = vmatpush1.xpose.msra.mxu0 %v251
        %274 = vmatprep.subr.mxu0 0.0
        %275 = vmatpush1.xpose.msra.mxu0 %v252
        %276 = vmatprep.subr.mxu0 0.0
        %277 = vmatpush1.xpose.msra.mxu0 %v253
        %278 = vmatprep.subr.mxu0 0.0
        %279 = vmatpush1.xpose.msra.mxu0 %v254
        %280 = vmatprep.subr.mxu0 0.0
        %281 = vmatpush1.xpose.msra.mxu0 %v255
        %282 = vmatprep.subr.mxu0 0.0
        %283 = vmatpush1.xpose.msra.mxu0 %v256
        %284 = vmatprep.subr.mxu0 0.0
        %285 = vmatpush1.xpose.msra.mxu0 %v257
        %286 = vmatprep.subr.mxu0 0.0
        %287 = vmatpush1.xpose.msra.mxu0 %v258
        %288 = vmatprep.subr.mxu0 0.0
        %289 = vmatpush1.xpose.msra.mxu0 %v259
        %290 = vmatprep.subr.mxu0 0.0
        %291 = vmatpush1.xpose.msra.mxu0 %v260
        %292 = vmatprep.subr.mxu0 0.0
        %293 = vmatpush1.xpose.msra.mxu0 %v261
        %294 = vmatprep.subr.mxu0 0.0
        %295 = vmatpush1.xpose.msra.mxu0 0.0
        %296 = vmatprep.subr.mxu0 0.0
        %297 = vmatpush1.xpose.msra.mxu0 0.0
        %298 = vmatprep.subr.mxu0 0.0
        %299 = vmatpush1.xpose.msra.mxu0 0.0
        %300 = vmatprep.subr.mxu0 0.0
        %301 = vmatpush1.xpose.msra.mxu0 0.0
        %302 = vmatprep.subr.mxu0 0.0
        %303 = vmatpush1.xpose.msra.mxu0 0.0
        %304 = vmatprep.subr.mxu0 0.0
        %305 = vmatpush1.xpose.msra.mxu0 0.0
        %306 = vmatprep.subr.mxu0 0.0
        %307 = vmatpush1.xpose.msra.mxu0 0.0
        %308 = vmatprep.subr.mxu0 0.0
        %309 = vmatpush1.xpose.msra.mxu0 0.0
        %310 = vmatprep.subr.mxu0 0.0
        %311 = vmatpush1.xpose.msra.mxu0 0.0
        %312 = vmatprep.subr.mxu0 0.0
        %313 = vmatpush1.xpose.msra.mxu0 0.0
        %314 = vmatprep.subr.mxu0 0.0
        %315 = vmatpush1.xpose.msra.mxu0 0.0
        %316 = vmatprep.subr.mxu0 0.0
        %317 = vmatpush1.xpose.msra.mxu0 0.0
        %318 = vmatprep.subr.mxu0 0.0
        %319 = vmatpush1.xpose.msra.mxu0 0.0
        %320 = vmatprep.subr.mxu0 0.0
        %321 = vmatpush1.xpose.msra.mxu0 0.0
        %322 = vmatprep.subr.mxu0 0.0
        %323 = vmatpush1.xpose.msra.mxu0 0.0
        %324 = vmatprep.subr.mxu0 0.0
        %325 = vmatpush1.xpose.msra.mxu0 0.0
        %326 = vmatprep.mubr.f32.mxu0 0.0
        %327 = vmatmul.mubr.f32.gmra.mrb[0].mxu0 %v238
        %v328 = vpop.f32.mrb[0].mxu0
        %v329 = vadd.f32 0.0, %v328
        %v330 = vpop.f32.mrb[0].mxu0
        %331 = vmatprep.mubr.f32.mxu0 0.0
        %332 = vmatmul.mubr.f32.gmra.mrb[0].mxu0 %v239
        %v333 = vpop.f32.mrb[0].mxu0
        %v334 = vadd.f32 0.0, %v333
        %v335 = vpop.f32.mrb[0].mxu0
        %336 = vmatprep.mubr.f32.mxu0 0.0
        %337 = vmatmul.mubr.f32.gmra.mrb[0].mxu0 %v240
        %v338 = vpop.f32.mrb[0].mxu0
        %v339 = vadd.f32 0.0, %v338
        %v340 = vpop.f32.mrb[0].mxu0
        %341 = vmatprep.mubr.f32.mxu0 0.0
        %342 = vmatmul.mubr.f32.gmra.mrb[0].mxu0 %v241
        %v343 = vpop.f32.mrb[0].mxu0
        %v344 = vadd.f32 0.0, %v343
        %v345 = vpop.f32.mrb[0].mxu0
        %346 = vmatprep.mubr.f32.mxu0 0.0
        %347 = vmatmul.mubr.f32.gmra.mrb[0].mxu0 %v242
        %v348 = vpop.f32.mrb[0].mxu0
        %v349 = vadd.f32 0.0, %v348
        %v350 = vpop.f32.mrb[0].mxu0
        %351 = vmatprep.mubr.f32.mxu0 0.0
        %352 = vmatmul.mubr.f32.gmra.mrb[0].mxu0 %v243
        %v353 = vpop.f32.mrb[0].mxu0
        %v354 = vadd.f32 0.0, %v353
        %v355 = vpop.f32.mrb[0].mxu0
        %356 = vmatprep.mubr.f32.mxu0 0.0
        %357 = vmatmul.mubr.f32.gmra.mrb[0].mxu0 %v244
        %v358 = vpop.f32.mrb[0].mxu0
        %v359 = vadd.f32 0.0, %v358
        %v360 = vpop.f32.mrb[0].mxu0
        %361 = vmatprep.mubr.f32.mxu0 0.0
        %362 = vmatmul.mubr.f32.gmra.mrb[0].mxu0 %v245
        %v363 = vpop.f32.mrb[0].mxu0
        %v364 = vadd.f32 0.0, %v363
        %v365 = vpop.f32.mrb[0].mxu0
        %366 = vdwg.mxu0
        %v367 = vadd.f32 %v230, %v329
        %v368 = vadd.f32 %v231, %v334
        %v369 = vadd.f32 %v232, %v339
        %v370 = vadd.f32 %v233, %v344
        %v371 = vadd.f32 %v234, %v349
        %v372 = vadd.f32 %v235, %v354
        %v373 = vadd.f32 %v236, %v359
        %v374 = vadd.f32 %v237, %v364
        %375 = vst [vmem:[#allocation2] sm:$0xff] %v367
        %376 = vst [vmem:[#allocation2 + $0x8] sm:$0xff] %v368
        %377 = vst [vmem:[#allocation2 + $0x10] sm:$0xff] %v369
        %378 = vst [vmem:[#allocation2 + $0x18] sm:$0xff] %v370
        %379 = vst [vmem:[#allocation2 + $0x20] sm:$0xff] %v371
        %380 = vst [vmem:[#allocation2 + $0x28] sm:$0xff] %v372
        %381 = vst [vmem:[#allocation2 + $0x30] sm:$0xff] %v373
        %382 = vst [vmem:[#allocation2 + $0x38] sm:$0xff] %v374
        %p383 = scmp.eq.s32.totalorder %s27, 1
        // Predicated region
        $region41: #{tpu_custom_call.1} parent=27 // pred_check
          %p384 = pneg %p383
        $region42: #{tpu_custom_call.1} parent=27 // pred_check_branch
          %386 = sbr.rel (%p384) target = $region44
        $region43: #{tpu_custom_call.1} parent=27 // pred_region
          %v387 = vld [vmem:[#allocation2] sm:$0xff]
          %v388 = vld [vmem:[#allocation2 + $0x8] sm:$0xff]
          %v389 = vld [vmem:[#allocation2 + $0x10] sm:$0xff]
          %v390 = vld [vmem:[#allocation2 + $0x18] sm:$0xff]
          %v391 = vld [vmem:[#allocation2 + $0x20] sm:$0xff]
          %v392 = vld [vmem:[#allocation2 + $0x28] sm:$0xff]
          %v393 = vld [vmem:[#allocation2 + $0x30] sm:$0xff]
          %v394 = vld [vmem:[#allocation2 + $0x38] sm:$0xff]
          %v395 = vadd.f32 %v387, %v388
          %v396 = vadd.f32 %v395, %v389
          %v397 = vadd.f32 %v396, %v390
          %v398 = vadd.f32 %v397, %v391
          %v399 = vadd.f32 %v398, %v392
          %v400 = vadd.f32 %v399, %v393
          %v401 = vadd.f32 %v400, %v394
          %v402 = vrot.slane %v401, 4
          %v403 = vadd.f32 %v401, %v402
          %v404 = vrot.slane %v403, 2
          %v405 = vadd.f32 %v403, %v404
          %v406 = vrot.slane %v405, 1
          %v407 = vadd.f32 %v405, %v406
          %v408 = vmul.f32 %v387, %v387
          %v409 = vmul.f32 %v388, %v388
          %v410 = vmul.f32 %v389, %v389
          %v411 = vmul.f32 %v390, %v390
          %v412 = vmul.f32 %v391, %v391
          %v413 = vmul.f32 %v392, %v392
          %v414 = vmul.f32 %v393, %v393
          %v415 = vmul.f32 %v394, %v394
          %v416 = vadd.f32 %v408, %v409
          %v417 = vadd.f32 %v416, %v410
          %v418 = vadd.f32 %v417, %v411
          %v419 = vadd.f32 %v418, %v412
          %v420 = vadd.f32 %v419, %v413
          %v421 = vadd.f32 %v420, %v414
          %v422 = vadd.f32 %v421, %v415
          %v423 = vrot.slane %v422, 4
          %v424 = vadd.f32 %v422, %v423
          %v425 = vrot.slane %v424, 2
          %v426 = vadd.f32 %v424, %v425
          %v427 = vrot.slane %v426, 1
          %v428 = vadd.f32 %v426, %v427
          %v429 = vmul.f32 %v407, 0.015625
          %v430 = vmul.f32 %v428, 0.015625
          %v431 = vmul.f32 %v429, %v429
          %v432 = vsub.f32 %v430, %v431
          %v433 = vadd.f32 %v432, 0.0001
          %v434 = vrsqrt.pop %v433
          %v435 = vmul.f32 %v429, %v434
          %v436 = vmul.f32 %v387, %v434
          %v437 = vmul.f32 %v388, %v434
          %v438 = vmul.f32 %v389, %v434
          %v439 = vmul.f32 %v390, %v434
          %v440 = vmul.f32 %v391, %v434
          %v441 = vmul.f32 %v392, %v434
          %v442 = vmul.f32 %v393, %v434
          %v443 = vmul.f32 %v394, %v434
          %v444 = vsub.f32 %v436, %v435
          %v445 = vsub.f32 %v437, %v435
          %v446 = vsub.f32 %v438, %v435
          %v447 = vsub.f32 %v439, %v435
          %v448 = vsub.f32 %v440, %v435
          %v449 = vsub.f32 %v441, %v435
          %v450 = vsub.f32 %v442, %v435
          %v451 = vsub.f32 %v443, %v435
          %vm452 = vcmp.ge.f32.partialorder %v444, 0.0
          %vm453 = vcmp.ge.f32.partialorder %v445, 0.0
          %vm454 = vcmp.ge.f32.partialorder %v446, 0.0
          %vm455 = vcmp.ge.f32.partialorder %v447, 0.0
          %vm456 = vcmp.ge.f32.partialorder %v448, 0.0
          %vm457 = vcmp.ge.f32.partialorder %v449, 0.0
          %vm458 = vcmp.ge.f32.partialorder %v450, 0.0
          %vm459 = vcmp.ge.f32.partialorder %v451, 0.0
          %v460 = vmul.f32 %v444, 0.01
          %v461 = vmul.f32 %v445, 0.01
          %v462 = vmul.f32 %v446, 0.01
          %v463 = vmul.f32 %v447, 0.01
          %v464 = vmul.f32 %v448, 0.01
          %v465 = vmul.f32 %v449, 0.01
          %v466 = vmul.f32 %v450, 0.01
          %v467 = vmul.f32 %v451, 0.01
          %v468 = vsel %vm452, %v444, %v460
          %v469 = vsel %vm453, %v445, %v461
          %v470 = vsel %vm454, %v446, %v462
          %v471 = vsel %vm455, %v447, %v463
          %v472 = vsel %vm456, %v448, %v464
          %v473 = vsel %vm457, %v449, %v465
          %v474 = vsel %vm458, %v450, %v466
          %v475 = vsel %vm459, %v451, %v467
          %476 = vst [vmem:[%s216] sm:$0xff] %v468
          %477 = vst [vmem:[%s216 + $0x8] sm:$0xff] %v469
          %478 = vst [vmem:[%s216 + $0x10] sm:$0xff] %v470
          %479 = vst [vmem:[%s216 + $0x18] sm:$0xff] %v471
          %480 = vst [vmem:[%s216 + $0x20] sm:$0xff] %v472
          %481 = vst [vmem:[%s216 + $0x28] sm:$0xff] %v473
          %482 = vst [vmem:[%s216 + $0x30] sm:$0xff] %v474
          %483 = vst [vmem:[%s216 + $0x38] sm:$0xff] %v475
        $region44: #{tpu_custom_call.1} parent=27 // pred_fallthru
          _
        %s484 = sand.u32 %s96, 1
        %s485 = scalar_lea.sflag [#allocation5], %s484
        %s486 = sand.u32 %s96, 1
        %s487 = smul.addr %s486, 64
        %s488 = scalar_lea.vmem [#allocation8], %s487
        // Predicated region
        $region45: #{tpu_custom_call.1} parent=27 // pred_check
          %p489 = pneg %p106
        $region46: #{tpu_custom_call.1} parent=27 // pred_check_branch
          %491 = sbr.rel (%p489) target = $region48
        $region47: #{tpu_custom_call.1} parent=27 // pred_region
          %s493 = ssub.s32 1024, 1024
          %494 = vsyncadd %s485, %s493
          %s495 = smul.addr %s26, 128
          %s496 = scalar_lea.hbm %s2, %s495
          %s497 = sshll.u32 %s488, 4
          %s498 = int_to_ptr.vmem [resolvable:$true] %s497
          %503 = dma.vmem_to_hbm [thread:$0]  %s498, 1024, %s496, %s485, 128, 256, 8
        $region48: #{tpu_custom_call.1} parent=27 // pred_fallthru
          _
      $region28: #{tpu_custom_call.1} parent=5 // pred_fallthru
        _
      %p504 = scmp.le.s32.totalorder 2, %s17
      // Predicated region
      $region49: #{tpu_custom_call.1} parent=5 // pred_check
        %p505 = pneg %p504
      $region50: #{tpu_custom_call.1} parent=5 // pred_check_branch
        %507 = sbr.rel (%p505) target = $region52
      $region51: #{tpu_custom_call.1} parent=5 // pred_region
        %s508 = ssub.s32 %s17, 2
        // Predicated region
        $region53: #{tpu_custom_call.1} parent=51 // pred_check
          %p509 = pneg %p112
        $region54: #{tpu_custom_call.1} parent=51 // pred_check_branch
          %511 = sbr.rel (%p509) target = $region56
        $region55: #{tpu_custom_call.1} parent=51 // pred_region
          %s512 = sand.u32 %s97, 1
          %s513 = scalar_lea.sflag [#allocation5], %s512
          %s514 = sand.u32 %s97, 1
          %s515 = smul.addr %s514, 64
          %s516 = scalar_lea.vmem [#allocation8], %s515
          %517 = dma.done %s513, 1024
        $region56: #{tpu_custom_call.1} parent=51 // pred_fallthru
          _
      $region52: #{tpu_custom_call.1} parent=5 // pred_fallthru
        _
    $region6: #{tpu_custom_call.1} parent=1 // loop_footer
      %s21 = sadd.s32 1, %s17
    $region7: #{tpu_custom_call.1} parent=1 // loop_footer_branch
      %16 = sbr.rel target = $region3
    $region8: #{tpu_custom_call.1} parent=1 // loop_exit
      _
    %518 = vsyncpa [#allocation4], 1
    %s519 = scalar_lea.sflag [#allocation4], 1
    %520 = vsyncpa %s519, 1
    %521 = vsyncpa [#allocation7], 1
    %s522 = scalar_lea.sflag [#allocation7], 1
    %523 = vsyncpa %s522, 1
    %524 = vsyncpa [#allocation5], 1
    %s525 = scalar_lea.sflag [#allocation5], 1
    %526 = vsyncpa %s525, 1

</llo_original>
